<compile_context>
chip_gen: v6e
topology: v6e:2x2x1
jax: 0.10.0
libtpu: 0.0.40
codegen_flags: <defaults>
</compile_context>

<pallas_src>
import functools

import jax
import jax.numpy as jnp
import numpy as np
from jax.experimental import pallas as pl
from jax.experimental.pallas import tpu as pltpu


def _round_up(n, m):
    return ((n + m - 1) // m) * m


def _choose_tiling(B, L):
    """Pick (TB, B_pad): sequences per grid step and the padded batch.

    Targets ~2048 sequence rows per step (live f32 intermediates are ~5 KiB
    per row -> ~12-16 MiB, inside the 32 MiB scoped-VMEM we request and well
    under v7x's 64 MiB physical VMEM).  TB is always a multiple of 8
    (sublane-legal block) and, once the batch is big enough to split, we
    force >=2 grid steps so the "parallel" grid axis can use both v7x cores.
    """
    ROWS_TARGET = 2048
    tb_cap = max(8, (ROWS_TARGET // max(L, 1)) // 8 * 8)
    tb = min(_round_up(B, 8), tb_cap)
    b_pad = _round_up(B, tb)
    if b_pad // tb < 2 and b_pad > 8:       # give megacore >=2 steps
        tb = max(8, (tb // 2) // 8 * 8)
        b_pad = _round_up(B, tb)
    return tb, b_pad


def pack_params(conv1_w, conv1_b, conv2_w, conv2_b, fc_w, fc_b,
                *, L, H, O, C, TB):
    """Pack weights / biases / boundary masks into resident slabs.
    Done ONCE per parameter set, outside the per-call jitted path."""
    conv1_w = np.asarray(conv1_w, np.float32)   # (H, 1, 3)
    conv1_b = np.asarray(conv1_b, np.float32)   # (H,)
    conv2_w = np.asarray(conv2_w, np.float32)   # (H, H, 3)
    conv2_b = np.asarray(conv2_b, np.float32)   # (H,)
    fc_w = np.asarray(fc_w, np.float32)         # (O, H)
    fc_b = np.asarray(fc_b, np.float32)         # (O,)

    # Small f32 slab: rows [conv1 taps k=0..2 | b1 | b2 | b_fc | pad | pad].
    # Zero-padded lanes keep the padded channels exactly zero through ReLU.
    small = np.zeros((8, C), np.float32)
    small[0:3, :H] = conv1_w[:, 0, :].T
    small[3, :H] = conv1_b
    small[4, :H] = conv2_b
    small[5, :O] = fc_b

    # bf16 MXU slab: conv2 taps stacked row-wise (3 x (C,C)), then fc weight.
    wts = np.zeros((4 * C, C), np.float32)
    for k in range(3):
        wts[k * C:k * C + H, :H] = conv2_w[:, :, k].T       # (Cin, Cout)
    wts[3 * C:3 * C + H, :O] = fc_w.T
    wts = wts.astype(jnp.bfloat16)

    # Boundary masks reproducing Conv1d's zero padding after pltpu.roll
    # (roll wraps around; these zero the wrapped rows).  Identical for every
    # grid tile because every tile holds TB whole sequences of length L.
    pos = np.arange(TB * L) % L
    masks = np.zeros((TB * L, 2 * C), np.float32)
    masks[:, 0:C] = (pos != 0).astype(np.float32)[:, None]          # "not first"
    masks[:, C:2 * C] = (pos != L - 1).astype(np.float32)[:, None]  # "not last"

    return jnp.asarray(small), jnp.asarray(wts), jnp.asarray(masks)


def _proof_cnn_kernel(x_ref, smallp_ref, wts_ref, mask_ref, out_ref, *, L, C, TB):
    """One grid step: TB whole sequences of length L, C (=128) lanes.

    x_ref      : (TB*L, 1)    f32   flattened input (single input channel)
    smallp_ref : (8, C)       f32   rows: [conv1 taps k=0..2 | b1 | b2 | b_fc]
    wts_ref    : (4*C, C)     bf16  rows: [conv2 tap0 | tap1 | tap2 | fc]
    mask_ref   : (TB*L, 2*C)  f32   [not-first | not-last] boundary masks
    out_ref    : (TB, C)      f32   lane-padded logits
    """
    BLb = TB * L

    # ---- resident parameters (static slices; constant index_map) --------
    w1 = smallp_ref[0:3, :]                     # (3, C) conv1 taps
    b1 = smallp_ref[3:4, :]
    b2 = smallp_ref[4:5, :]
    bfc = smallp_ref[5:6, :]
    w2k0 = wts_ref[0 * C:1 * C, :]              # (C, C) bf16, tap for x[l-1]
    w2k1 = wts_ref[1 * C:2 * C, :]              # (C, C) bf16, tap for x[l]
    w2k2 = wts_ref[2 * C:3 * C, :]              # (C, C) bf16, tap for x[l+1]
    wfc = wts_ref[3 * C:4 * C, :]               # (C, C) bf16, fc weight
    nf = mask_ref[:, 0:C]                       # zero at first pos of each seq
    nl = mask_ref[:, C:2 * C]                   # zero at last pos of each seq

    # ---- conv1 (Cin = 1): roll shifts + tap multiplies (pure VPU) --------
    x = jnp.broadcast_to(x_ref[...], (BLb, C))                 # (BLb, C)
    x_m = pltpu.roll(x, 1, 0) * nf                             # x[l-1], zero-pad
    x_p = pltpu.roll(x, BLb - 1, 0) * nl                       # x[l+1], zero-pad
    h1 = x_m * w1[0:1, :] + x * w1[1:2, :] + x_p * w1[2:3, :] + b1
    h1 = jnp.maximum(h1, 0.0)                                  # ReLU

    # ---- conv2: three accumulating K=C bf16 MXU matmuls (no f32 concat) --
    h1_m = pltpu.roll(h1, 1, 0) * nf
    h1_p = pltpu.roll(h1, BLb - 1, 0) * nl
    h2 = (jnp.dot(h1_m.astype(jnp.bfloat16), w2k0, preferred_element_type=jnp.float32)
          + jnp.dot(h1.astype(jnp.bfloat16), w2k1, preferred_element_type=jnp.float32)
          + jnp.dot(h1_p.astype(jnp.bfloat16), w2k2, preferred_element_type=jnp.float32)
          + b2)
    h2 = jnp.maximum(h2, 0.0)                                  # (BLb, C)

    # ---- AdaptiveAvgPool1d(1): per-sequence mean over L (XLU reduce) -----
    pooled = jnp.mean(h2.reshape(TB, L, C), axis=1)            # (TB, C)

    # ---- fc (lane-dense, output padded to C lanes) ------------------------
    out_ref[...] = jnp.dot(pooled.astype(jnp.bfloat16), wfc,
                           preferred_element_type=jnp.float32) + bfc


@functools.partial(jax.jit, static_argnames=("B", "L", "O", "C", "TB", "B_pad"))
def proof_predictor_cnn(x_bcl, small, wts, masks, *, B, L, O, C, TB, B_pad):
    """x_bcl: (B, 1, L) like PyTorch NCL.  Returns (B, O) float32 logits."""
    nb = B_pad // TB

    x = x_bcl[:, 0, :].astype(jnp.float32)                     # (B, L)
    if B_pad != B:
        x = jnp.pad(x, ((0, B_pad - B), (0, 0)))
    x_flat = x.reshape(B_pad * L, 1)

    kernel = functools.partial(_proof_cnn_kernel, L=L, C=C, TB=TB)
    out_padded = pl.pallas_call(
        kernel,
        out_shape=jax.ShapeDtypeStruct((B_pad, C), jnp.float32),
        grid=(nb,),
        in_specs=[
            pl.BlockSpec((TB * L, 1), lambda i: (i, 0)),       # per-tile activations
            pl.BlockSpec((8, C), lambda i: (0, 0)),            # resident taps/biases
            pl.BlockSpec((4 * C, C), lambda i: (0, 0)),        # resident bf16 weights
            pl.BlockSpec((TB * L, 2 * C), lambda i: (0, 0)),   # resident boundary masks
        ],
        out_specs=pl.BlockSpec((TB, C), lambda i: (i, 0)),
        compiler_params=pltpu.CompilerParams(
            dimension_semantics=("parallel",),
            vmem_limit_bytes=32 * 1024 * 1024),
    )(x_flat, small, wts, masks)
    # TODO(synk): large-batch consumers could take the lane-dense (B_pad, C)
    # slab directly and skip this extra HBM slice pass.
    return out_padded[:B, :O]


def ref_forward(x_bcl, conv1_w, conv1_b, conv2_w, conv2_b, fc_w, fc_b):
    """Pure-JAX f32 reference matching PyTorch Conv1d semantics (padding=1)."""
    B, _, L = x_bcl.shape
    x = x_bcl[:, 0, :]                                   # (B, L)
    xp = jnp.pad(x, ((0, 0), (1, 1)))
    taps = jnp.stack([xp[:, k:k + L] for k in range(3)], axis=-1)  # (B, L, 3)
    h1 = jnp.einsum('blk,hk->bhl', taps, conv1_w[:, 0, :]) + conv1_b[None, :, None]
    h1 = jnp.maximum(h1, 0.0)                            # (B, H, L)
    h1p = jnp.pad(h1, ((0, 0), (0, 0), (1, 1)))
    h2 = sum(jnp.einsum('bcl,oc->bol', h1p[:, :, k:k + L], conv2_w[:, :, k])
             for k in range(3)) + conv2_b[None, :, None]
    h2 = jnp.maximum(h2, 0.0)
    pooled = jnp.mean(h2, axis=-1)                       # (B, H)
    return pooled @ fc_w.T + fc_b


if __name__ == "__main__":
    # Shapes consistent with the module: input_size (sequence length) = 16,
    # hidden_size = 128 (as in the spec), output_size (unique rules) = 8, batch = 2.
    # TODO(synk): output_size in the original script comes from the dataset
    # (len(rule_to_idx)); 8 is a stand-in since `data` is not available.
    B, L, H, O = 2, 16, 128, 8

    key = jax.random.PRNGKey(0)
    kx, k1w, k1b, k2w, k2b, kfw, kfb = jax.random.split(key, 7)

    x = jax.random.normal(kx, (B, 1, L), dtype=jnp.float32)

    # Deterministic PyTorch-style uniform(-1/sqrt(fan_in), 1/sqrt(fan_in)) init.
    s1 = 1.0 / np.sqrt(1 * 3)
    conv1_w = jax.random.uniform(k1w, (H, 1, 3), jnp.float32, -s1, s1)
    conv1_b = jax.random.uniform(k1b, (H,), jnp.float32, -s1, s1)
    s2 = 1.0 / np.sqrt(H * 3)
    conv2_w = jax.random.uniform(k2w, (H, H, 3), jnp.float32, -s2, s2)
    conv2_b = jax.random.uniform(k2b, (H,), jnp.float32, -s2, s2)
    sf = 1.0 / np.sqrt(H)
    fc_w = jax.random.uniform(kfw, (O, H), jnp.float32, -sf, sf)
    fc_b = jax.random.uniform(kfb, (O,), jnp.float32, -sf, sf)

    # One-time setup: tiling choice + parameter/mask packing (outside jit).
    C = _round_up(max(H, O), 128)
    TB, B_pad = _choose_tiling(B, L)
    small, wts, masks = pack_params(conv1_w, conv1_b, conv2_w, conv2_b,
                                    fc_w, fc_b, L=L, H=H, O=O, C=C, TB=TB)

    out = proof_predictor_cnn(x, small, wts, masks,
                              B=B, L=L, O=O, C=C, TB=TB, B_pad=B_pad)
    out = jax.block_until_ready(out)

    ref = ref_forward(x, conv1_w, conv1_b, conv2_w, conv2_b, fc_w, fc_b)
    ref = jax.block_until_ready(ref)

    assert out.shape == (B, O), out.shape
    # Tolerance relaxed vs. pure-f32: matmul operands are fed to the MXU in
    # bf16 (f32 accumulation), which introduces ~1e-3 absolute error here.
    np.testing.assert_allclose(np.asarray(out), np.asarray(ref),
                               rtol=5e-2, atol=1e-2)
    print("KERNEL_OK")
</pallas_src>

<mosaic_0001>
module attributes {stable_mosaic.version = 11 : i64} {
  func.func @_proof_cnn_kernel(%arg0: i32, %arg1: memref<128x1xf32, #tpu.memory_space<vmem>>, %arg2: memref<8x128xf32, #tpu.memory_space<vmem>>, %arg3: memref<512x128xbf16, #tpu.memory_space<vmem>>, %arg4: memref<128x256xf32, #tpu.memory_space<vmem>>, %arg5: memref<8x128xf32, #tpu.memory_space<vmem>>) attributes {dimension_semantics = [#tpu.dimension_semantics<parallel>], iteration_bounds = array<i64: 1>, scalar_prefetch = 0 : i64, scratch_operands = 0 : i64, tpu.core_type = #tpu.core_type<tc>, window_params = [{transform_indices = @transform_0, window_bounds = array<i64: 128, 1>}, {pipeline_mode = #tpu.pipeline_mode<synchronous>, transform_indices = @transform_1, window_bounds = array<i64: 8, 128>}, {pipeline_mode = #tpu.pipeline_mode<synchronous>, transform_indices = @transform_2, window_bounds = array<i64: 512, 128>}, {pipeline_mode = #tpu.pipeline_mode<synchronous>, transform_indices = @transform_3, window_bounds = array<i64: 128, 256>}, {transform_indices = @transform_4, window_bounds = array<i64: 8, 128>}]} {
    %c0 = arith.constant 0 : index
    %c0_0 = arith.constant 0 : index
    %0 = vector.load %arg2[%c0, %c0_0] : memref<8x128xf32, #tpu.memory_space<vmem>>, vector<3x128xf32>
    %c3 = arith.constant 3 : index
    %c0_1 = arith.constant 0 : index
    %1 = vector.load %arg2[%c3, %c0_1] : memref<8x128xf32, #tpu.memory_space<vmem>>, vector<1x128xf32>
    %c4 = arith.constant 4 : index
    %c0_2 = arith.constant 0 : index
    %2 = vector.load %arg2[%c4, %c0_2] : memref<8x128xf32, #tpu.memory_space<vmem>>, vector<1x128xf32>
    %c5 = arith.constant 5 : index
    %c0_3 = arith.constant 0 : index
    %3 = vector.load %arg2[%c5, %c0_3] : memref<8x128xf32, #tpu.memory_space<vmem>>, vector<1x128xf32>
    %c0_4 = arith.constant 0 : index
    %c0_5 = arith.constant 0 : index
    %4 = vector.load %arg3[%c0_4, %c0_5] : memref<512x128xbf16, #tpu.memory_space<vmem>>, vector<128x128xbf16>
    %c128 = arith.constant 128 : index
    %c0_6 = arith.constant 0 : index
    %5 = vector.load %arg3[%c128, %c0_6] : memref<512x128xbf16, #tpu.memory_space<vmem>>, vector<128x128xbf16>
    %c256 = arith.constant 256 : index
    %c0_7 = arith.constant 0 : index
    %6 = vector.load %arg3[%c256, %c0_7] : memref<512x128xbf16, #tpu.memory_space<vmem>>, vector<128x128xbf16>
    %c384 = arith.constant 384 : index
    %c0_8 = arith.constant 0 : index
    %7 = vector.load %arg3[%c384, %c0_8] : memref<512x128xbf16, #tpu.memory_space<vmem>>, vector<128x128xbf16>
    %c0_9 = arith.constant 0 : index
    %c0_10 = arith.constant 0 : index
    %8 = vector.load %arg4[%c0_9, %c0_10] : memref<128x256xf32, #tpu.memory_space<vmem>>, vector<128x128xf32>
    %c0_11 = arith.constant 0 : index
    %c128_12 = arith.constant 128 : index
    %9 = vector.load %arg4[%c0_11, %c128_12] : memref<128x256xf32, #tpu.memory_space<vmem>>, vector<128x128xf32>
    %c0_13 = arith.constant 0 : index
    %c0_14 = arith.constant 0 : index
    %10 = vector.load %arg1[%c0_13, %c0_14] : memref<128x1xf32, #tpu.memory_space<vmem>>, vector<128x1xf32>
    %11 = vector.shape_cast %10 : vector<128x1xf32> to vector<128x1xf32>
    %12 = vector.broadcast %11 : vector<128x1xf32> to vector<128x128xf32>
    %c1_i32 = arith.constant 1 : i32
    %13 = tpu.dynamic_rotate %12 by %c1_i32 dim 0 : vector<128x128xf32>, i32 -> vector<128x128xf32>
    %14 = arith.mulf %13, %8 : vector<128x128xf32>
    %c127_i32 = arith.constant 127 : i32
    %15 = tpu.dynamic_rotate %12 by %c127_i32 dim 0 : vector<128x128xf32>, i32 -> vector<128x128xf32>
    %16 = arith.mulf %15, %9 : vector<128x128xf32>
    %17 = vector.extract_strided_slice %0 {offsets = [0, 0], sizes = [1, 128], strides = [1, 1]} : vector<3x128xf32> to vector<1x128xf32>
    %18 = vector.broadcast %17 : vector<1x128xf32> to vector<128x128xf32>
    %19 = arith.mulf %14, %18 : vector<128x128xf32>
    %20 = vector.extract_strided_slice %0 {offsets = [1, 0], sizes = [1, 128], strides = [1, 1]} : vector<3x128xf32> to vector<1x128xf32>
    %21 = vector.broadcast %20 : vector<1x128xf32> to vector<128x128xf32>
    %22 = arith.mulf %12, %21 : vector<128x128xf32>
    %23 = arith.addf %19, %22 : vector<128x128xf32>
    %24 = vector.extract_strided_slice %0 {offsets = [2, 0], sizes = [1, 128], strides = [1, 1]} : vector<3x128xf32> to vector<1x128xf32>
    %25 = vector.broadcast %24 : vector<1x128xf32> to vector<128x128xf32>
    %26 = arith.mulf %16, %25 : vector<128x128xf32>
    %27 = arith.addf %23, %26 : vector<128x128xf32>
    %28 = vector.broadcast %1 : vector<1x128xf32> to vector<128x128xf32>
    %29 = arith.addf %27, %28 : vector<128x128xf32>
    %cst = arith.constant 0.000000e+00 : f32
    %30 = vector.broadcast %cst : f32 to vector<128x128xf32>
    %31 = arith.maximumf %29, %30 : vector<128x128xf32>
    %c1_i32_15 = arith.constant 1 : i32
    %32 = tpu.dynamic_rotate %31 by %c1_i32_15 dim 0 : vector<128x128xf32>, i32 -> vector<128x128xf32>
    %33 = arith.mulf %32, %8 : vector<128x128xf32>
    %c127_i32_16 = arith.constant 127 : i32
    %34 = tpu.dynamic_rotate %31 by %c127_i32_16 dim 0 : vector<128x128xf32>, i32 -> vector<128x128xf32>
    %35 = arith.mulf %34, %9 : vector<128x128xf32>
    %36 = arith.truncf %33 : vector<128x128xf32> to vector<128x128xbf16>
    %cst_17 = arith.constant dense<0.000000e+00> : vector<128x128xf32>
    %37 = tpu.matmul %36, %4, %cst_17 {dimension_numbers = #tpu.dot_dimension_numbers<[1], [0], [0], [1], [0, 0, 1, 1], [], []>} : vector<128x128xbf16>, vector<128x128xbf16>, vector<128x128xf32> -> vector<128x128xf32>
    %38 = arith.truncf %31 : vector<128x128xf32> to vector<128x128xbf16>
    %cst_18 = arith.constant dense<0.000000e+00> : vector<128x128xf32>
    %39 = tpu.matmul %38, %5, %cst_18 {dimension_numbers = #tpu.dot_dimension_numbers<[1], [0], [0], [1], [0, 0, 1, 1], [], []>} : vector<128x128xbf16>, vector<128x128xbf16>, vector<128x128xf32> -> vector<128x128xf32>
    %40 = arith.addf %37, %39 : vector<128x128xf32>
    %41 = arith.truncf %35 : vector<128x128xf32> to vector<128x128xbf16>
    %cst_19 = arith.constant dense<0.000000e+00> : vector<128x128xf32>
    %42 = tpu.matmul %41, %6, %cst_19 {dimension_numbers = #tpu.dot_dimension_numbers<[1], [0], [0], [1], [0, 0, 1, 1], [], []>} : vector<128x128xbf16>, vector<128x128xbf16>, vector<128x128xf32> -> vector<128x128xf32>
    %43 = arith.addf %40, %42 : vector<128x128xf32>
    %44 = vector.broadcast %2 : vector<1x128xf32> to vector<128x128xf32>
    %45 = arith.addf %43, %44 : vector<128x128xf32>
    %cst_20 = arith.constant 0.000000e+00 : f32
    %46 = vector.broadcast %cst_20 : f32 to vector<128x128xf32>
    %47 = arith.maximumf %45, %46 : vector<128x128xf32>
    %48 = vector.shape_cast %47 : vector<128x128xf32> to vector<8x16x128xf32>
    %cst_21 = arith.constant dense<0.000000e+00> : vector<8x128xf32>
    %49 = vector.multi_reduction <add>, %48, %cst_21 [1] : vector<8x16x128xf32> to vector<8x128xf32>
    %cst_22 = arith.constant 1.600000e+01 : f32
    %50 = vector.broadcast %cst_22 : f32 to vector<8x128xf32>
    %51 = arith.divf %49, %50 : vector<8x128xf32>
    %52 = arith.truncf %51 : vector<8x128xf32> to vector<8x128xbf16>
    %cst_23 = arith.constant dense<0.000000e+00> : vector<8x128xf32>
    %53 = tpu.matmul %52, %7, %cst_23 {dimension_numbers = #tpu.dot_dimension_numbers<[1], [0], [0], [1], [0, 0, 1, 1], [], []>} : vector<8x128xbf16>, vector<128x128xbf16>, vector<8x128xf32> -> vector<8x128xf32>
    %54 = vector.broadcast %3 : vector<1x128xf32> to vector<8x128xf32>
    %55 = arith.addf %53, %54 : vector<8x128xf32>
    %c0_24 = arith.constant 0 : index
    %c0_25 = arith.constant 0 : index
    %56 = vector.load %arg5[%c0_24, %c0_25] : memref<8x128xf32, #tpu.memory_space<vmem>>, vector<8x128xf32>
    tpu.vector_store %arg5[%c0_24, %c0_25], %55 {strides = array<i32>} : memref<8x128xf32, #tpu.memory_space<vmem>>, vector<8x128xf32>,
    return
  }
  func.func @transform_0(%arg0: i32) -> (i32, i32) {
    %c0_i32 = arith.constant 0 : i32
    %c0_i32_0 = arith.constant 0 : i32
    return %arg0, %c0_i32 : i32, i32
  }
  func.func @transform_1(%arg0: i32) -> (i32, i32) {
    %c0_i32 = arith.constant 0 : i32
    %c0_i32_0 = arith.constant 0 : i32
    %c0_i32_1 = arith.constant 0 : i32
    return %c0_i32, %c0_i32_0 : i32, i32
  }
  func.func @transform_2(%arg0: i32) -> (i32, i32) {
    %c0_i32 = arith.constant 0 : i32
    %c0_i32_0 = arith.constant 0 : i32
    %c0_i32_1 = arith.constant 0 : i32
    return %c0_i32, %c0_i32_0 : i32, i32
  }
  func.func @transform_3(%arg0: i32) -> (i32, i32) {
    %c0_i32 = arith.constant 0 : i32
    %c0_i32_0 = arith.constant 0 : i32
    %c0_i32_1 = arith.constant 0 : i32
    return %c0_i32, %c0_i32_0 : i32, i32
  }
  func.func @transform_4(%arg0: i32) -> (i32, i32) {
    %c0_i32 = arith.constant 0 : i32
    %c0_i32_0 = arith.constant 0 : i32
    return %arg0, %c0_i32 : i32, i32
  }
}

</mosaic_0001>

<llo_original>
// kernel: proof_predictor_cnn.1
$region0: #{proof_predictor_cnn.1}
  #allocation0 [shape = 'u32[]', space=smem, size = 0x4, offset = 0x4, fixed_abs, tag = 'smem constant byte address 0x4 - core index']
  #allocation1 [shape = 'u32[144,128]{1,0:T(1,128)}', space=vmem, size = 0x12000, scoped, tag = 'internal scratch']
  %s0 = inlined_call_operand.vmem [shape: f32[128,1], index: 0, kind: input, shape index: {}]
  %s1 = inlined_call_operand.vmem [shape: f32[8,128], index: 1, kind: input, shape index: {}]
  %s2 = inlined_call_operand.hbm [shape: bf16[512,128], index: 2, kind: input, shape index: {}]
  %s3 = inlined_call_operand.hbm [shape: f32[128,256], index: 3, kind: input, shape index: {}]
  %s4 = inlined_call_operand.vmem [shape: f32[8,128], index: 4, kind: output, shape index: {}]
  %s5 = sld [smem:[#allocation0]]
  $region34: #{proof_predictor_cnn.1} parent=0
    _
  %s7 = ssub.s32 1, %s5
  %s8 = scalar_select 0, %s7, %s5
  $region1: #{proof_predictor_cnn.1} parent=0
    #allocation2 [shape = 'u8[131072]{0}', space=vmem, size = 0x20000, scoped, tag = 'input window, operand 2, single buffered']
    #allocation3 [shape = 's32[1]{0}', space=sflag, size = 0x4, scoped, tag = 'scoped memory for proof_predictor_cnn.1']
    #allocation4 [shape = 'u8[131072]{0}', space=vmem, size = 0x20000, scoped, tag = 'input window, operand 3, single buffered']
    #allocation5 [shape = 's32[1]{0}', space=sflag, size = 0x4, scoped, tag = 'scoped memory for proof_predictor_cnn.1']
    %9 = vsyncpa [#allocation3], 0
    %10 = vsyncpa [#allocation5], 0
    // Predicated region
    $region2: #{proof_predictor_cnn.1} parent=1 // pred_check
      _
    $region3: #{proof_predictor_cnn.1} parent=1 // pred_check_branch
      %12 = sbr.rel (0) target = $region5
    $region4: #{proof_predictor_cnn.1} parent=1 // pred_region
      _
    $region5: #{proof_predictor_cnn.1} parent=1 // pred_fallthru
      _
    // Predicated region
    $region6: #{proof_predictor_cnn.1} parent=1 // pred_check
      _
    $region7: #{proof_predictor_cnn.1} parent=1 // pred_check_branch
      %14 = sbr.rel (0) target = $region9
    $region8: #{proof_predictor_cnn.1} parent=1 // pred_region
      _
    $region9: #{proof_predictor_cnn.1} parent=1 // pred_fallthru
      _
    // Predicated region
    $region10: #{proof_predictor_cnn.1} parent=1 // pred_check
      _
    $region11: #{proof_predictor_cnn.1} parent=1 // pred_check_branch
      %16 = sbr.rel (0) target = $region13
    $region12: #{proof_predictor_cnn.1} parent=1 // pred_region
      %s18 = ssub.s32 4096, 4096
      %19 = vsyncadd [#allocation3], %s18
      %s20 = sshll.u32 [#allocation2], 4
      %s21 = int_to_ptr.vmem [resolvable:$true] %s20
      %26 = dma.hbm_to_vmem [thread:$0]  %s2, 4096, %s21, [#allocation3], 64, 64, 4
    $region13: #{proof_predictor_cnn.1} parent=1 // pred_fallthru
      _
    // Predicated region
    $region14: #{proof_predictor_cnn.1} parent=1 // pred_check
      _
    $region15: #{proof_predictor_cnn.1} parent=1 // pred_check_branch
      %28 = sbr.rel (0) target = $region17
    $region16: #{proof_predictor_cnn.1} parent=1 // pred_region
      %s30 = ssub.s32 4096, 4096
      %31 = vsyncadd [#allocation5], %s30
      %s32 = sshll.u32 [#allocation4], 4
      %s33 = int_to_ptr.vmem [resolvable:$true] %s32
      %38 = dma.hbm_to_vmem [thread:$0]  %s3, 4096, %s33, [#allocation5], 256, 256, 16
    $region17: #{proof_predictor_cnn.1} parent=1 // pred_fallthru
      _
    // Predicated region
    $region18: #{proof_predictor_cnn.1} parent=1 // pred_check
      _
    $region19: #{proof_predictor_cnn.1} parent=1 // pred_check_branch
      %40 = sbr.rel (0) target = $region21
    $region20: #{proof_predictor_cnn.1} parent=1 // pred_region
      %41 = dma.done [#allocation3], 4096
    $region21: #{proof_predictor_cnn.1} parent=1 // pred_fallthru
      _
    // Predicated region
    $region22: #{proof_predictor_cnn.1} parent=1 // pred_check
      _
    $region23: #{proof_predictor_cnn.1} parent=1 // pred_check_branch
      %43 = sbr.rel (0) target = $region25
    $region24: #{proof_predictor_cnn.1} parent=1 // pred_region
      %44 = dma.done [#allocation5], 4096
    $region25: #{proof_predictor_cnn.1} parent=1 // pred_fallthru
      _
    %v46 = vld [vmem:[%s1] sm:$0x7]
    %v47 = vld [vmem:[%s1 + $0x3] sm:$0x1]
    %v48 = vld [vmem:[%s1 + $0x4] sm:$0x1]
    %v49 = vld [vmem:[%s1 + $0x5] sm:$0x1]
    %v50 = vld [vmem:[#allocation2] sm:$0xf]
    %v51 = vld [vmem:[#allocation2 + $0x4] sm:$0xf]
    %v52 = vld [vmem:[#allocation2 + $0x8] sm:$0xf]
    %v53 = vld [vmem:[#allocation2 + $0xc] sm:$0xf]
    %v54 = vld [vmem:[#allocation2 + $0x10] sm:$0xf]
    %v55 = vld [vmem:[#allocation2 + $0x14] sm:$0xf]
    %v56 = vld [vmem:[#allocation2 + $0x18] sm:$0xf]
    %v57 = vld [vmem:[#allocation2 + $0x1c] sm:$0xf]
    %v58 = vld [vmem:[#allocation2 + $0x20] sm:$0xf]
    %v59 = vld [vmem:[#allocation2 + $0x24] sm:$0xf]
    %v60 = vld [vmem:[#allocation2 + $0x28] sm:$0xf]
    %v61 = vld [vmem:[#allocation2 + $0x2c] sm:$0xf]
    %v62 = vld [vmem:[#allocation2 + $0x30] sm:$0xf]
    %v63 = vld [vmem:[#allocation2 + $0x34] sm:$0xf]
    %v64 = vld [vmem:[#allocation2 + $0x38] sm:$0xf]
    %v65 = vld [vmem:[#allocation2 + $0x3c] sm:$0xf]
    %v66 = vld [vmem:[#allocation2 + $0x40] sm:$0xf]
    %v67 = vld [vmem:[#allocation2 + $0x44] sm:$0xf]
    %v68 = vld [vmem:[#allocation2 + $0x48] sm:$0xf]
    %v69 = vld [vmem:[#allocation2 + $0x4c] sm:$0xf]
    %v70 = vld [vmem:[#allocation2 + $0x50] sm:$0xf]
    %v71 = vld [vmem:[#allocation2 + $0x54] sm:$0xf]
    %v72 = vld [vmem:[#allocation2 + $0x58] sm:$0xf]
    %v73 = vld [vmem:[#allocation2 + $0x5c] sm:$0xf]
    %v74 = vld [vmem:[#allocation2 + $0x60] sm:$0xf]
    %v75 = vld [vmem:[#allocation2 + $0x64] sm:$0xf]
    %v76 = vld [vmem:[#allocation2 + $0x68] sm:$0xf]
    %v77 = vld [vmem:[#allocation2 + $0x6c] sm:$0xf]
    %v78 = vld [vmem:[#allocation2 + $0x70] sm:$0xf]
    %v79 = vld [vmem:[#allocation2 + $0x74] sm:$0xf]
    %v80 = vld [vmem:[#allocation2 + $0x78] sm:$0xf]
    %v81 = vld [vmem:[#allocation2 + $0x7c] sm:$0xf]
    %v82 = vld [vmem:[#allocation2 + $0x80] sm:$0xf]
    %v83 = vld [vmem:[#allocation2 + $0x84] sm:$0xf]
    %v84 = vld [vmem:[#allocation2 + $0x88] sm:$0xf]
    %v85 = vld [vmem:[#allocation2 + $0x8c] sm:$0xf]
    %v86 = vld [vmem:[#allocation2 + $0x90] sm:$0xf]
    %v87 = vld [vmem:[#allocation2 + $0x94] sm:$0xf]
    %v88 = vld [vmem:[#allocation2 + $0x98] sm:$0xf]
    %v89 = vld [vmem:[#allocation2 + $0x9c] sm:$0xf]
    %v90 = vld [vmem:[#allocation2 + $0xa0] sm:$0xf]
    %v91 = vld [vmem:[#allocation2 + $0xa4] sm:$0xf]
    %v92 = vld [vmem:[#allocation2 + $0xa8] sm:$0xf]
    %v93 = vld [vmem:[#allocation2 + $0xac] sm:$0xf]
    %v94 = vld [vmem:[#allocation2 + $0xb0] sm:$0xf]
    %v95 = vld [vmem:[#allocation2 + $0xb4] sm:$0xf]
    %v96 = vld [vmem:[#allocation2 + $0xb8] sm:$0xf]
    %v97 = vld [vmem:[#allocation2 + $0xbc] sm:$0xf]
    %v98 = vld [vmem:[#allocation2 + $0xc0] sm:$0xf]
    %v99 = vld [vmem:[#allocation2 + $0xc4] sm:$0xf]
    %v100 = vld [vmem:[#allocation2 + $0xc8] sm:$0xf]
    %v101 = vld [vmem:[#allocation2 + $0xcc] sm:$0xf]
    %v102 = vld [vmem:[#allocation2 + $0xd0] sm:$0xf]
    %v103 = vld [vmem:[#allocation2 + $0xd4] sm:$0xf]
    %v104 = vld [vmem:[#allocation2 + $0xd8] sm:$0xf]
    %v105 = vld [vmem:[#allocation2 + $0xdc] sm:$0xf]
    %v106 = vld [vmem:[#allocation2 + $0xe0] sm:$0xf]
    %v107 = vld [vmem:[#allocation2 + $0xe4] sm:$0xf]
    %v108 = vld [vmem:[#allocation2 + $0xe8] sm:$0xf]
    %v109 = vld [vmem:[#allocation2 + $0xec] sm:$0xf]
    %v110 = vld [vmem:[#allocation2 + $0xf0] sm:$0xf]
    %v111 = vld [vmem:[#allocation2 + $0xf4] sm:$0xf]
    %v112 = vld [vmem:[#allocation2 + $0xf8] sm:$0xf]
    %v113 = vld [vmem:[#allocation2 + $0xfc] sm:$0xf]
    %v114 = vld [vmem:[#allocation4] sm:$0xff]
    %v115 = vld [vmem:[#allocation4 + $0x10] sm:$0xff]
    %v116 = vld [vmem:[#allocation4 + $0x20] sm:$0xff]
    %v117 = vld [vmem:[#allocation4 + $0x30] sm:$0xff]
    %v118 = vld [vmem:[#allocation4 + $0x40] sm:$0xff]
    %v119 = vld [vmem:[#allocation4 + $0x50] sm:$0xff]
    %v120 = vld [vmem:[#allocation4 + $0x60] sm:$0xff]
    %v121 = vld [vmem:[#allocation4 + $0x70] sm:$0xff]
    %v122 = vld [vmem:[#allocation4 + $0x80] sm:$0xff]
    %v123 = vld [vmem:[#allocation4 + $0x90] sm:$0xff]
    %v124 = vld [vmem:[#allocation4 + $0xa0] sm:$0xff]
    %v125 = vld [vmem:[#allocation4 + $0xb0] sm:$0xff]
    %v126 = vld [vmem:[#allocation4 + $0xc0] sm:$0xff]
    %v127 = vld [vmem:[#allocation4 + $0xd0] sm:$0xff]
    %v128 = vld [vmem:[#allocation4 + $0xe0] sm:$0xff]
    %v129 = vld [vmem:[#allocation4 + $0xf0] sm:$0xff]
    %v130 = vld [vmem:[#allocation4 + $0x8] sm:$0xff]
    %v131 = vld [vmem:[#allocation4 + $0x18] sm:$0xff]
    %v132 = vld [vmem:[#allocation4 + $0x28] sm:$0xff]
    %v133 = vld [vmem:[#allocation4 + $0x38] sm:$0xff]
    %v134 = vld [vmem:[#allocation4 + $0x48] sm:$0xff]
    %v135 = vld [vmem:[#allocation4 + $0x58] sm:$0xff]
    %v136 = vld [vmem:[#allocation4 + $0x68] sm:$0xff]
    %v137 = vld [vmem:[#allocation4 + $0x78] sm:$0xff]
    %v138 = vld [vmem:[#allocation4 + $0x88] sm:$0xff]
    %v139 = vld [vmem:[#allocation4 + $0x98] sm:$0xff]
    %v140 = vld [vmem:[#allocation4 + $0xa8] sm:$0xff]
    %v141 = vld [vmem:[#allocation4 + $0xb8] sm:$0xff]
    %v142 = vld [vmem:[#allocation4 + $0xc8] sm:$0xff]
    %v143 = vld [vmem:[#allocation4 + $0xd8] sm:$0xff]
    %v144 = vld [vmem:[#allocation4 + $0xe8] sm:$0xff]
    %v145 = vld [vmem:[#allocation4 + $0xf8] sm:$0xff]
    %v146 = vld [vmem:[%s0] sm:$0xff]
    %v147 = vld [vmem:[%s0 + $0x8] sm:$0xff]
    %v148 = vld [vmem:[%s0 + $0x10] sm:$0xff]
    %v149 = vld [vmem:[%s0 + $0x18] sm:$0xff]
    %v150 = vld [vmem:[%s0 + $0x20] sm:$0xff]
    %v151 = vld [vmem:[%s0 + $0x28] sm:$0xff]
    %v152 = vld [vmem:[%s0 + $0x30] sm:$0xff]
    %v153 = vld [vmem:[%s0 + $0x38] sm:$0xff]
    %v154 = vld [vmem:[%s0 + $0x40] sm:$0xff]
    %v155 = vld [vmem:[%s0 + $0x48] sm:$0xff]
    %v156 = vld [vmem:[%s0 + $0x50] sm:$0xff]
    %v157 = vld [vmem:[%s0 + $0x58] sm:$0xff]
    %v158 = vld [vmem:[%s0 + $0x60] sm:$0xff]
    %v159 = vld [vmem:[%s0 + $0x68] sm:$0xff]
    %v160 = vld [vmem:[%s0 + $0x70] sm:$0xff]
    %v161 = vld [vmem:[%s0 + $0x78] sm:$0xff]
    %163 = vset.pattern.permute.xlu0 0
    %164 = vperm.xlu0 %163, %v146
    %v165 = vpop.permute.xlu0 %164
    %168 = vset.pattern.permute.xlu0 0
    %169 = vperm.xlu0 %168, %v147
    %v170 = vpop.permute.xlu0 %169
    %173 = vset.pattern.permute.xlu0 0
    %174 = vperm.xlu0 %173, %v148
    %v175 = vpop.permute.xlu0 %174
    %178 = vset.pattern.permute.xlu0 0
    %179 = vperm.xlu0 %178, %v149
    %v180 = vpop.permute.xlu0 %179
    %183 = vset.pattern.permute.xlu0 0
    %184 = vperm.xlu0 %183, %v150
    %v185 = vpop.permute.xlu0 %184
    %188 = vset.pattern.permute.xlu0 0
    %189 = vperm.xlu0 %188, %v151
    %v190 = vpop.permute.xlu0 %189
    %193 = vset.pattern.permute.xlu0 0
    %194 = vperm.xlu0 %193, %v152
    %v195 = vpop.permute.xlu0 %194
    %198 = vset.pattern.permute.xlu0 0
    %199 = vperm.xlu0 %198, %v153
    %v200 = vpop.permute.xlu0 %199
    %203 = vset.pattern.permute.xlu0 0
    %204 = vperm.xlu0 %203, %v154
    %v205 = vpop.permute.xlu0 %204
    %208 = vset.pattern.permute.xlu0 0
    %209 = vperm.xlu0 %208, %v155
    %v210 = vpop.permute.xlu0 %209
    %213 = vset.pattern.permute.xlu0 0
    %214 = vperm.xlu0 %213, %v156
    %v215 = vpop.permute.xlu0 %214
    %218 = vset.pattern.permute.xlu0 0
    %219 = vperm.xlu0 %218, %v157
    %v220 = vpop.permute.xlu0 %219
    %223 = vset.pattern.permute.xlu0 0
    %224 = vperm.xlu0 %223, %v158
    %v225 = vpop.permute.xlu0 %224
    %228 = vset.pattern.permute.xlu0 0
    %229 = vperm.xlu0 %228, %v159
    %v230 = vpop.permute.xlu0 %229
    %233 = vset.pattern.permute.xlu0 0
    %234 = vperm.xlu0 %233, %v160
    %v235 = vpop.permute.xlu0 %234
    %238 = vset.pattern.permute.xlu0 0
    %239 = vperm.xlu0 %238, %v161
    %v240 = vpop.permute.xlu0 %239
    %v242 = vrot.slane %v165, 7
    %v243 = vrot.slane %v170, 7
    %v244 = vrot.slane %v175, 7
    %v245 = vrot.slane %v180, 7
    %v246 = vrot.slane %v185, 7
    %v247 = vrot.slane %v190, 7
    %v248 = vrot.slane %v195, 7
    %v249 = vrot.slane %v200, 7
    %v250 = vrot.slane %v205, 7
    %v251 = vrot.slane %v210, 7
    %v252 = vrot.slane %v215, 7
    %v253 = vrot.slane %v220, 7
    %v254 = vrot.slane %v225, 7
    %v255 = vrot.slane %v230, 7
    %v256 = vrot.slane %v235, 7
    %v257 = vrot.slane %v240, 7
    %v258 = vlaneseq
    %v259 = vshrl.u32 %v258, 7
    %vm260 = vcmp.lt.s32.totalorder %v259, 1
    %v261 = vsel %vm260, %v256, %v257
    %v262 = vsel %vm260, %v255, %v256
    %v263 = vsel %vm260, %v254, %v255
    %v264 = vsel %vm260, %v253, %v254
    %v265 = vsel %vm260, %v252, %v253
    %v266 = vsel %vm260, %v251, %v252
    %v267 = vsel %vm260, %v250, %v251
    %v268 = vsel %vm260, %v249, %v250
    %v269 = vsel %vm260, %v248, %v249
    %v270 = vsel %vm260, %v247, %v248
    %v271 = vsel %vm260, %v246, %v247
    %v272 = vsel %vm260, %v245, %v246
    %v273 = vsel %vm260, %v244, %v245
    %v274 = vsel %vm260, %v243, %v244
    %v275 = vsel %vm260, %v242, %v243
    %v276 = vsel %vm260, %v257, %v242
    %v277 = vmul.f32 %v276, %v114
    %v278 = vmul.f32 %v275, %v115
    %v279 = vmul.f32 %v274, %v116
    %v280 = vmul.f32 %v273, %v117
    %v281 = vmul.f32 %v272, %v118
    %v282 = vmul.f32 %v271, %v119
    %v283 = vmul.f32 %v270, %v120
    %v284 = vmul.f32 %v269, %v121
    %v285 = vmul.f32 %v268, %v122
    %v286 = vmul.f32 %v267, %v123
    %v287 = vmul.f32 %v266, %v124
    %v288 = vmul.f32 %v265, %v125
    %v289 = vmul.f32 %v264, %v126
    %v290 = vmul.f32 %v263, %v127
    %v291 = vmul.f32 %v262, %v128
    %v292 = vmul.f32 %v261, %v129
    %v293 = vrot.slane %v165, 1
    %v294 = vrot.slane %v170, 1
    %v295 = vrot.slane %v175, 1
    %v296 = vrot.slane %v180, 1
    %v297 = vrot.slane %v185, 1
    %v298 = vrot.slane %v190, 1
    %v299 = vrot.slane %v195, 1
    %v300 = vrot.slane %v200, 1
    %v301 = vrot.slane %v205, 1
    %v302 = vrot.slane %v210, 1
    %v303 = vrot.slane %v215, 1
    %v304 = vrot.slane %v220, 1
    %v305 = vrot.slane %v225, 1
    %v306 = vrot.slane %v230, 1
    %v307 = vrot.slane %v235, 1
    %v308 = vrot.slane %v240, 1
    %vm309 = vcmp.lt.s32.totalorder %v259, 7
    %v310 = vsel %vm309, %v307, %v308
    %v311 = vsel %vm309, %v306, %v307
    %v312 = vsel %vm309, %v305, %v306
    %v313 = vsel %vm309, %v304, %v305
    %v314 = vsel %vm309, %v303, %v304
    %v315 = vsel %vm309, %v302, %v303
    %v316 = vsel %vm309, %v301, %v302
    %v317 = vsel %vm309, %v300, %v301
    %v318 = vsel %vm309, %v299, %v300
    %v319 = vsel %vm309, %v298, %v299
    %v320 = vsel %vm309, %v297, %v298
    %v321 = vsel %vm309, %v296, %v297
    %v322 = vsel %vm309, %v295, %v296
    %v323 = vsel %vm309, %v294, %v295
    %v324 = vsel %vm309, %v293, %v294
    %v325 = vsel %vm309, %v308, %v293
    %v326 = vmul.f32 %v324, %v130
    %v327 = vmul.f32 %v323, %v131
    %v328 = vmul.f32 %v322, %v132
    %v329 = vmul.f32 %v321, %v133
    %v330 = vmul.f32 %v320, %v134
    %v331 = vmul.f32 %v319, %v135
    %v332 = vmul.f32 %v318, %v136
    %v333 = vmul.f32 %v317, %v137
    %v334 = vmul.f32 %v316, %v138
    %v335 = vmul.f32 %v315, %v139
    %v336 = vmul.f32 %v314, %v140
    %v337 = vmul.f32 %v313, %v141
    %v338 = vmul.f32 %v312, %v142
    %v339 = vmul.f32 %v311, %v143
    %v340 = vmul.f32 %v310, %v144
    %v341 = vmul.f32 %v325, %v145
    %v342 = vlaneseq
    %v343 = vshrl.u32 %v342, 7
    %v344 = vsub.s32 0, %v343
    %v345 = vrot.slane %v46, %v344
    %v346 = vmul.f32 %v277, %v345
    %v347 = vmul.f32 %v278, %v345
    %v348 = vmul.f32 %v279, %v345
    %v349 = vmul.f32 %v280, %v345
    %v350 = vmul.f32 %v281, %v345
    %v351 = vmul.f32 %v282, %v345
    %v352 = vmul.f32 %v283, %v345
    %v353 = vmul.f32 %v284, %v345
    %v354 = vmul.f32 %v285, %v345
    %v355 = vmul.f32 %v286, %v345
    %v356 = vmul.f32 %v287, %v345
    %v357 = vmul.f32 %v288, %v345
    %v358 = vmul.f32 %v289, %v345
    %v359 = vmul.f32 %v290, %v345
    %v360 = vmul.f32 %v291, %v345
    %v361 = vmul.f32 %v292, %v345
    %v362 = vlaneseq
    %v363 = vshrl.u32 %v362, 7
    %v364 = vsub.s32 1, %v363
    %v365 = vrot.slane %v46, %v364
    %v366 = vmul.f32 %v165, %v365
    %v367 = vmul.f32 %v170, %v365
    %v368 = vmul.f32 %v175, %v365
    %v369 = vmul.f32 %v180, %v365
    %v370 = vmul.f32 %v185, %v365
    %v371 = vmul.f32 %v190, %v365
    %v372 = vmul.f32 %v195, %v365
    %v373 = vmul.f32 %v200, %v365
    %v374 = vmul.f32 %v205, %v365
    %v375 = vmul.f32 %v210, %v365
    %v376 = vmul.f32 %v215, %v365
    %v377 = vmul.f32 %v220, %v365
    %v378 = vmul.f32 %v225, %v365
    %v379 = vmul.f32 %v230, %v365
    %v380 = vmul.f32 %v235, %v365
    %v381 = vmul.f32 %v240, %v365
    %v382 = vadd.f32 %v346, %v366
    %v383 = vadd.f32 %v347, %v367
    %v384 = vadd.f32 %v348, %v368
    %v385 = vadd.f32 %v349, %v369
    %v386 = vadd.f32 %v350, %v370
    %v387 = vadd.f32 %v351, %v371
    %v388 = vadd.f32 %v352, %v372
    %v389 = vadd.f32 %v353, %v373
    %v390 = vadd.f32 %v354, %v374
    %v391 = vadd.f32 %v355, %v375
    %v392 = vadd.f32 %v356, %v376
    %v393 = vadd.f32 %v357, %v377
    %v394 = vadd.f32 %v358, %v378
    %v395 = vadd.f32 %v359, %v379
    %v396 = vadd.f32 %v360, %v380
    %v397 = vadd.f32 %v361, %v381
    %v398 = vlaneseq
    %v399 = vshrl.u32 %v398, 7
    %v400 = vsub.s32 2, %v399
    %v401 = vrot.slane %v46, %v400
    %v402 = vmul.f32 %v326, %v401
    %v403 = vmul.f32 %v327, %v401
    %v404 = vmul.f32 %v328, %v401
    %v405 = vmul.f32 %v329, %v401
    %v406 = vmul.f32 %v330, %v401
    %v407 = vmul.f32 %v331, %v401
    %v408 = vmul.f32 %v332, %v401
    %v409 = vmul.f32 %v333, %v401
    %v410 = vmul.f32 %v334, %v401
    %v411 = vmul.f32 %v335, %v401
    %v412 = vmul.f32 %v336, %v401
    %v413 = vmul.f32 %v337, %v401
    %v414 = vmul.f32 %v338, %v401
    %v415 = vmul.f32 %v339, %v401
    %v416 = vmul.f32 %v340, %v401
    %v417 = vmul.f32 %v341, %v401
    %v418 = vadd.f32 %v382, %v402
    %v419 = vadd.f32 %v383, %v403
    %v420 = vadd.f32 %v384, %v404
    %v421 = vadd.f32 %v385, %v405
    %v422 = vadd.f32 %v386, %v406
    %v423 = vadd.f32 %v387, %v407
    %v424 = vadd.f32 %v388, %v408
    %v425 = vadd.f32 %v389, %v409
    %v426 = vadd.f32 %v390, %v410
    %v427 = vadd.f32 %v391, %v411
    %v428 = vadd.f32 %v392, %v412
    %v429 = vadd.f32 %v393, %v413
    %v430 = vadd.f32 %v394, %v414
    %v431 = vadd.f32 %v395, %v415
    %v432 = vadd.f32 %v396, %v416
    %v433 = vadd.f32 %v397, %v417
    %v434 = vlaneseq
    %v435 = vshrl.u32 %v434, 7
    %v436 = vsub.s32 0, %v435
    %v437 = vrot.slane %v47, %v436
    %v438 = vadd.f32 %v418, %v437
    %v439 = vadd.f32 %v419, %v437
    %v440 = vadd.f32 %v420, %v437
    %v441 = vadd.f32 %v421, %v437
    %v442 = vadd.f32 %v422, %v437
    %v443 = vadd.f32 %v423, %v437
    %v444 = vadd.f32 %v424, %v437
    %v445 = vadd.f32 %v425, %v437
    %v446 = vadd.f32 %v426, %v437
    %v447 = vadd.f32 %v427, %v437
    %v448 = vadd.f32 %v428, %v437
    %v449 = vadd.f32 %v429, %v437
    %v450 = vadd.f32 %v430, %v437
    %v451 = vadd.f32 %v431, %v437
    %v452 = vadd.f32 %v432, %v437
    %v453 = vadd.f32 %v433, %v437
    %v454 = vmax.f32 %v438, 0.0
    %v455 = vmax.f32 %v439, 0.0
    %v456 = vmax.f32 %v440, 0.0
    %v457 = vmax.f32 %v441, 0.0
    %v458 = vmax.f32 %v442, 0.0
    %v459 = vmax.f32 %v443, 0.0
    %v460 = vmax.f32 %v444, 0.0
    %v461 = vmax.f32 %v445, 0.0
    %v462 = vmax.f32 %v446, 0.0
    %v463 = vmax.f32 %v447, 0.0
    %v464 = vmax.f32 %v448, 0.0
    %v465 = vmax.f32 %v449, 0.0
    %v466 = vmax.f32 %v450, 0.0
    %v467 = vmax.f32 %v451, 0.0
    %v468 = vmax.f32 %v452, 0.0
    %v469 = vmax.f32 %v453, 0.0
    %v470 = vrot.slane %v454, 7
    %v471 = vrot.slane %v455, 7
    %v472 = vrot.slane %v456, 7
    %v473 = vrot.slane %v457, 7
    %v474 = vrot.slane %v458, 7
    %v475 = vrot.slane %v459, 7
    %v476 = vrot.slane %v460, 7
    %v477 = vrot.slane %v461, 7
    %v478 = vrot.slane %v462, 7
    %v479 = vrot.slane %v463, 7
    %v480 = vrot.slane %v464, 7
    %v481 = vrot.slane %v465, 7
    %v482 = vrot.slane %v466, 7
    %v483 = vrot.slane %v467, 7
    %v484 = vrot.slane %v468, 7
    %v485 = vrot.slane %v469, 7
    %v486 = vsel %vm260, %v484, %v485
    %v487 = vsel %vm260, %v483, %v484
    %v488 = vsel %vm260, %v482, %v483
    %v489 = vsel %vm260, %v481, %v482
    %v490 = vsel %vm260, %v480, %v481
    %v491 = vsel %vm260, %v479, %v480
    %v492 = vsel %vm260, %v478, %v479
    %v493 = vsel %vm260, %v477, %v478
    %v494 = vsel %vm260, %v476, %v477
    %v495 = vsel %vm260, %v475, %v476
    %v496 = vsel %vm260, %v474, %v475
    %v497 = vsel %vm260, %v473, %v474
    %v498 = vsel %vm260, %v472, %v473
    %v499 = vsel %vm260, %v471, %v472
    %v500 = vsel %vm260, %v470, %v471
    %v501 = vsel %vm260, %v485, %v470
    %v502 = vmul.f32 %v501, %v114
    %v503 = vmul.f32 %v500, %v115
    %v504 = vmul.f32 %v499, %v116
    %v505 = vmul.f32 %v498, %v117
    %v506 = vmul.f32 %v497, %v118
    %v507 = vmul.f32 %v496, %v119
    %v508 = vmul.f32 %v495, %v120
    %v509 = vmul.f32 %v494, %v121
    %v510 = vmul.f32 %v493, %v122
    %v511 = vmul.f32 %v492, %v123
    %v512 = vmul.f32 %v491, %v124
    %v513 = vmul.f32 %v490, %v125
    %v514 = vmul.f32 %v489, %v126
    %v515 = vmul.f32 %v488, %v127
    %v516 = vmul.f32 %v487, %v128
    %v517 = vmul.f32 %v486, %v129
    %v518 = vrot.slane %v454, 1
    %v519 = vrot.slane %v455, 1
    %v520 = vrot.slane %v456, 1
    %v521 = vrot.slane %v457, 1
    %v522 = vrot.slane %v458, 1
    %v523 = vrot.slane %v459, 1
    %v524 = vrot.slane %v460, 1
    %v525 = vrot.slane %v461, 1
    %v526 = vrot.slane %v462, 1
    %v527 = vrot.slane %v463, 1
    %v528 = vrot.slane %v464, 1
    %v529 = vrot.slane %v465, 1
    %v530 = vrot.slane %v466, 1
    %v531 = vrot.slane %v467, 1
    %v532 = vrot.slane %v468, 1
    %v533 = vrot.slane %v469, 1
    %v534 = vsel %vm309, %v532, %v533
    %v535 = vsel %vm309, %v531, %v532
    %v536 = vsel %vm309, %v530, %v531
    %v537 = vsel %vm309, %v529, %v530
    %v538 = vsel %vm309, %v528, %v529
    %v539 = vsel %vm309, %v527, %v528
    %v540 = vsel %vm309, %v526, %v527
    %v541 = vsel %vm309, %v525, %v526
    %v542 = vsel %vm309, %v524, %v525
    %v543 = vsel %vm309, %v523, %v524
    %v544 = vsel %vm309, %v522, %v523
    %v545 = vsel %vm309, %v521, %v522
    %v546 = vsel %vm309, %v520, %v521
    %v547 = vsel %vm309, %v519, %v520
    %v548 = vsel %vm309, %v518, %v519
    %v549 = vsel %vm309, %v533, %v518
    %v550 = vmul.f32 %v548, %v130
    %v551 = vmul.f32 %v547, %v131
    %v552 = vmul.f32 %v546, %v132
    %v553 = vmul.f32 %v545, %v133
    %v554 = vmul.f32 %v544, %v134
    %v555 = vmul.f32 %v543, %v135
    %v556 = vmul.f32 %v542, %v136
    %v557 = vmul.f32 %v541, %v137
    %v558 = vmul.f32 %v540, %v138
    %v559 = vmul.f32 %v539, %v139
    %v560 = vmul.f32 %v538, %v140
    %v561 = vmul.f32 %v537, %v141
    %v562 = vmul.f32 %v536, %v142
    %v563 = vmul.f32 %v535, %v143
    %v564 = vmul.f32 %v534, %v144
    %v565 = vmul.f32 %v549, %v145
    %v566 = vpack.c.bf16 %v503, %v502
    %v567 = vpack.c.bf16 %v505, %v504
    %v568 = vpack.c.bf16 %v507, %v506
    %v569 = vpack.c.bf16 %v509, %v508
    %v570 = vpack.c.bf16 %v511, %v510
    %v571 = vpack.c.bf16 %v513, %v512
    %v572 = vpack.c.bf16 %v515, %v514
    %v573 = vpack.c.bf16 %v517, %v516
    %v574 = vpack.c.bf16 %v455, %v454
    %v575 = vpack.c.bf16 %v457, %v456
    %v576 = vpack.c.bf16 %v459, %v458
    %v577 = vpack.c.bf16 %v461, %v460
    %v578 = vpack.c.bf16 %v463, %v462
    %v579 = vpack.c.bf16 %v465, %v464
    %v580 = vpack.c.bf16 %v467, %v466
    %v581 = vpack.c.bf16 %v469, %v468
    %v598 = vunpack.c.l.b16 %v66
    %v599 = vunpack.c.l.b16 %v67
    %v600 = vunpack.c.l.b16 %v68
    %v601 = vunpack.c.l.b16 %v69
    %v602 = vunpack.c.l.b16 %v70
    %v603 = vunpack.c.l.b16 %v71
    %v604 = vunpack.c.l.b16 %v72
    %v605 = vunpack.c.l.b16 %v73
    %v606 = vunpack.c.l.b16 %v74
    %v607 = vunpack.c.l.b16 %v75
    %v608 = vunpack.c.l.b16 %v76
    %v609 = vunpack.c.l.b16 %v77
    %v610 = vunpack.c.l.b16 %v78
    %v611 = vunpack.c.l.b16 %v79
    %v612 = vunpack.c.l.b16 %v80
    %v613 = vunpack.c.l.b16 %v81
    %v614 = vpack.c.b16 %v599, %v598
    %v615 = vpack.c.b16 %v601, %v600
    %v616 = vpack.c.b16 %v603, %v602
    %v617 = vpack.c.b16 %v605, %v604
    %v618 = vpack.c.b16 %v607, %v606
    %v619 = vpack.c.b16 %v609, %v608
    %v620 = vpack.c.b16 %v611, %v610
    %v621 = vpack.c.b16 %v613, %v612
    %630 = vmatprep.subr.bf16.mxu0 0
    %631 = vmatpush1.bf16.msra.mxu0 %v621
    %632 = vmatprep.subr.bf16.mxu0 0
    %633 = vmatpush1.bf16.msra.mxu0 %v620
    %634 = vmatprep.subr.bf16.mxu0 0
    %635 = vmatpush1.bf16.msra.mxu0 %v619
    %636 = vmatprep.subr.bf16.mxu0 0
    %637 = vmatpush1.bf16.msra.mxu0 %v618
    %638 = vmatprep.subr.bf16.mxu0 0
    %639 = vmatpush1.bf16.msra.mxu0 %v617
    %640 = vmatprep.subr.bf16.mxu0 0
    %641 = vmatpush1.bf16.msra.mxu0 %v616
    %642 = vmatprep.subr.bf16.mxu0 0
    %643 = vmatpush1.bf16.msra.mxu0 %v615
    %644 = vmatprep.subr.bf16.mxu0 0
    %645 = vmatpush1.bf16.msra.mxu0 %v614
    %646 = vmatprep.subr.bf16.mxu0 0
    %647 = vmatpush2.bf16.msra.mxu0 0
    %648 = vmatprep.subr.bf16.mxu0 0
    %649 = vmatpush2.bf16.msra.mxu0 0
    %650 = vmatprep.subr.bf16.mxu0 0
    %651 = vmatpush2.bf16.msra.mxu0 0
    %652 = vmatprep.subr.bf16.mxu0 0
    %653 = vmatpush2.bf16.msra.mxu0 0
    %654 = vmatprep.subr.bf16.mxu0 0
    %655 = vmatpush2.bf16.msra.mxu0 0
    %656 = vmatprep.subr.bf16.mxu0 0
    %657 = vmatpush2.bf16.msra.mxu0 0
    %658 = vmatprep.subr.bf16.mxu0 0
    %659 = vmatpush2.bf16.msra.mxu0 0
    %660 = vmatprep.subr.bf16.mxu0 0
    %661 = vmatpush2.bf16.msra.mxu0 0
    %662 = vmatprep.mubr.bf16.mxu0 0
    %663 = vmatmul.mubr.bf16.gmra.mxu0 %v574
    %v664 = vpop.f32.mrf.mxu0
    %v665 = vadd.f32 0.0, %v664
    %v666 = vpop.f32.mrf.mxu0
    %v667 = vpop.f32.mrf.mxu0
    %v668 = vadd.f32 0.0, %v667
    %v669 = vpop.f32.mrf.mxu0
    %670 = vmatprep.mubr.bf16.mxu0 0
    %671 = vmatmul.mubr.bf16.gmra.mxu0 %v575
    %v672 = vpop.f32.mrf.mxu0
    %v673 = vadd.f32 0.0, %v672
    %v674 = vpop.f32.mrf.mxu0
    %v675 = vpop.f32.mrf.mxu0
    %v676 = vadd.f32 0.0, %v675
    %v677 = vpop.f32.mrf.mxu0
    %678 = vmatprep.mubr.bf16.mxu0 0
    %679 = vmatmul.mubr.bf16.gmra.mxu0 %v576
    %v680 = vpop.f32.mrf.mxu0
    %v681 = vadd.f32 0.0, %v680
    %v682 = vpop.f32.mrf.mxu0
    %v683 = vpop.f32.mrf.mxu0
    %v684 = vadd.f32 0.0, %v683
    %v685 = vpop.f32.mrf.mxu0
    %686 = vmatprep.mubr.bf16.mxu0 0
    %687 = vmatmul.mubr.bf16.gmra.mxu0 %v577
    %v688 = vpop.f32.mrf.mxu0
    %v689 = vadd.f32 0.0, %v688
    %v690 = vpop.f32.mrf.mxu0
    %v691 = vpop.f32.mrf.mxu0
    %v692 = vadd.f32 0.0, %v691
    %v693 = vpop.f32.mrf.mxu0
    %694 = vmatprep.mubr.bf16.mxu0 0
    %695 = vmatmul.mubr.bf16.gmra.mxu0 %v578
    %v696 = vpop.f32.mrf.mxu0
    %v697 = vadd.f32 0.0, %v696
    %v698 = vpop.f32.mrf.mxu0
    %v699 = vpop.f32.mrf.mxu0
    %v700 = vadd.f32 0.0, %v699
    %v701 = vpop.f32.mrf.mxu0
    %702 = vmatprep.mubr.bf16.mxu0 0
    %703 = vmatmul.mubr.bf16.gmra.mxu0 %v579
    %v704 = vpop.f32.mrf.mxu0
    %v705 = vadd.f32 0.0, %v704
    %v706 = vpop.f32.mrf.mxu0
    %v707 = vpop.f32.mrf.mxu0
    %v708 = vadd.f32 0.0, %v707
    %v709 = vpop.f32.mrf.mxu0
    %710 = vmatprep.mubr.bf16.mxu0 0
    %711 = vmatmul.mubr.bf16.gmra.mxu0 %v580
    %v712 = vpop.f32.mrf.mxu0
    %v713 = vadd.f32 0.0, %v712
    %v714 = vpop.f32.mrf.mxu0
    %v715 = vpop.f32.mrf.mxu0
    %v716 = vadd.f32 0.0, %v715
    %v717 = vpop.f32.mrf.mxu0
    %718 = vmatprep.mubr.bf16.mxu0 0
    %719 = vmatmul.mubr.bf16.gmra.mxu0 %v581
    %v720 = vpop.f32.mrf.mxu0
    %v721 = vadd.f32 0.0, %v720
    %v722 = vpop.f32.mrf.mxu0
    %v723 = vpop.f32.mrf.mxu0
    %v724 = vadd.f32 0.0, %v723
    %v725 = vpop.f32.mrf.mxu0
    %726 = vdwg.mxu0
    %v743 = vunpack.c.l.b16 %v50
    %v744 = vunpack.c.l.b16 %v51
    %v745 = vunpack.c.l.b16 %v52
    %v746 = vunpack.c.l.b16 %v53
    %v747 = vunpack.c.l.b16 %v54
    %v748 = vunpack.c.l.b16 %v55
    %v749 = vunpack.c.l.b16 %v56
    %v750 = vunpack.c.l.b16 %v57
    %v751 = vunpack.c.l.b16 %v58
    %v752 = vunpack.c.l.b16 %v59
    %v753 = vunpack.c.l.b16 %v60
    %v754 = vunpack.c.l.b16 %v61
    %v755 = vunpack.c.l.b16 %v62
    %v756 = vunpack.c.l.b16 %v63
    %v757 = vunpack.c.l.b16 %v64
    %v758 = vunpack.c.l.b16 %v65
    %v759 = vpack.c.b16 %v744, %v743
    %v760 = vpack.c.b16 %v746, %v745
    %v761 = vpack.c.b16 %v748, %v747
    %v762 = vpack.c.b16 %v750, %v749
    %v763 = vpack.c.b16 %v752, %v751
    %v764 = vpack.c.b16 %v754, %v753
    %v765 = vpack.c.b16 %v756, %v755
    %v766 = vpack.c.b16 %v758, %v757
    %775 = vmatprep.subr.bf16.mxu0 0
    %776 = vmatpush1.bf16.msra.mxu0 %v766
    %777 = vmatprep.subr.bf16.mxu0 0
    %778 = vmatpush1.bf16.msra.mxu0 %v765
    %779 = vmatprep.subr.bf16.mxu0 0
    %780 = vmatpush1.bf16.msra.mxu0 %v764
    %781 = vmatprep.subr.bf16.mxu0 0
    %782 = vmatpush1.bf16.msra.mxu0 %v763
    %783 = vmatprep.subr.bf16.mxu0 0
    %784 = vmatpush1.bf16.msra.mxu0 %v762
    %785 = vmatprep.subr.bf16.mxu0 0
    %786 = vmatpush1.bf16.msra.mxu0 %v761
    %787 = vmatprep.subr.bf16.mxu0 0
    %788 = vmatpush1.bf16.msra.mxu0 %v760
    %789 = vmatprep.subr.bf16.mxu0 0
    %790 = vmatpush1.bf16.msra.mxu0 %v759
    %791 = vmatprep.subr.bf16.mxu0 0
    %792 = vmatpush2.bf16.msra.mxu0 0
    %793 = vmatprep.subr.bf16.mxu0 0
    %794 = vmatpush2.bf16.msra.mxu0 0
    %795 = vmatprep.subr.bf16.mxu0 0
    %796 = vmatpush2.bf16.msra.mxu0 0
    %797 = vmatprep.subr.bf16.mxu0 0
    %798 = vmatpush2.bf16.msra.mxu0 0
    %799 = vmatprep.subr.bf16.mxu0 0
    %800 = vmatpush2.bf16.msra.mxu0 0
    %801 = vmatprep.subr.bf16.mxu0 0
    %802 = vmatpush2.bf16.msra.mxu0 0
    %803 = vmatprep.subr.bf16.mxu0 0
    %804 = vmatpush2.bf16.msra.mxu0 0
    %805 = vmatprep.subr.bf16.mxu0 0
    %806 = vmatpush2.bf16.msra.mxu0 0
    %807 = vmatprep.mubr.bf16.mxu0 0
    %808 = vmatmul.mubr.bf16.gmra.mxu0 %v566
    %v809 = vpop.f32.mrf.mxu0
    %v810 = vadd.f32 %v665, %v809
    %v811 = vpop.f32.mrf.mxu0
    %v812 = vpop.f32.mrf.mxu0
    %v813 = vadd.f32 %v668, %v812
    %v814 = vpop.f32.mrf.mxu0
    %815 = vmatprep.mubr.bf16.mxu0 0
    %816 = vmatmul.mubr.bf16.gmra.mxu0 %v567
    %v817 = vpop.f32.mrf.mxu0
    %v818 = vadd.f32 %v673, %v817
    %v819 = vpop.f32.mrf.mxu0
    %v820 = vpop.f32.mrf.mxu0
    %v821 = vadd.f32 %v676, %v820
    %v822 = vpop.f32.mrf.mxu0
    %823 = vmatprep.mubr.bf16.mxu0 0
    %824 = vmatmul.mubr.bf16.gmra.mxu0 %v568
    %v825 = vpop.f32.mrf.mxu0
    %v826 = vadd.f32 %v681, %v825
    %v827 = vpop.f32.mrf.mxu0
    %v828 = vpop.f32.mrf.mxu0
    %v829 = vadd.f32 %v684, %v828
    %v830 = vpop.f32.mrf.mxu0
    %831 = vmatprep.mubr.bf16.mxu0 0
    %832 = vmatmul.mubr.bf16.gmra.mxu0 %v569
    %v833 = vpop.f32.mrf.mxu0
    %v834 = vadd.f32 %v689, %v833
    %v835 = vpop.f32.mrf.mxu0
    %v836 = vpop.f32.mrf.mxu0
    %v837 = vadd.f32 %v692, %v836
    %v838 = vpop.f32.mrf.mxu0
    %839 = vmatprep.mubr.bf16.mxu0 0
    %840 = vmatmul.mubr.bf16.gmra.mxu0 %v570
    %v841 = vpop.f32.mrf.mxu0
    %v842 = vadd.f32 %v697, %v841
    %v843 = vpop.f32.mrf.mxu0
    %v844 = vpop.f32.mrf.mxu0
    %v845 = vadd.f32 %v700, %v844
    %v846 = vpop.f32.mrf.mxu0
    %847 = vmatprep.mubr.bf16.mxu0 0
    %848 = vmatmul.mubr.bf16.gmra.mxu0 %v571
    %v849 = vpop.f32.mrf.mxu0
    %v850 = vadd.f32 %v705, %v849
    %v851 = vpop.f32.mrf.mxu0
    %v852 = vpop.f32.mrf.mxu0
    %v853 = vadd.f32 %v708, %v852
    %v854 = vpop.f32.mrf.mxu0
    %855 = vmatprep.mubr.bf16.mxu0 0
    %856 = vmatmul.mubr.bf16.gmra.mxu0 %v572
    %v857 = vpop.f32.mrf.mxu0
    %v858 = vadd.f32 %v713, %v857
    %v859 = vpop.f32.mrf.mxu0
    %v860 = vpop.f32.mrf.mxu0
    %v861 = vadd.f32 %v716, %v860
    %v862 = vpop.f32.mrf.mxu0
    %863 = vmatprep.mubr.bf16.mxu0 0
    %864 = vmatmul.mubr.bf16.gmra.mxu0 %v573
    %v865 = vpop.f32.mrf.mxu0
    %v866 = vadd.f32 %v721, %v865
    %v867 = vpop.f32.mrf.mxu0
    %v868 = vpop.f32.mrf.mxu0
    %v869 = vadd.f32 %v724, %v868
    %v870 = vpop.f32.mrf.mxu0
    %871 = vdwg.mxu0
    %v872 = vpack.c.bf16 %v551, %v550
    %v873 = vpack.c.bf16 %v553, %v552
    %v874 = vpack.c.bf16 %v555, %v554
    %v875 = vpack.c.bf16 %v557, %v556
    %v876 = vpack.c.bf16 %v559, %v558
    %v877 = vpack.c.bf16 %v561, %v560
    %v878 = vpack.c.bf16 %v563, %v562
    %v879 = vpack.c.bf16 %v565, %v564
    %v896 = vunpack.c.l.b16 %v82
    %v897 = vunpack.c.l.b16 %v83
    %v898 = vunpack.c.l.b16 %v84
    %v899 = vunpack.c.l.b16 %v85
    %v900 = vunpack.c.l.b16 %v86
    %v901 = vunpack.c.l.b16 %v87
    %v902 = vunpack.c.l.b16 %v88
    %v903 = vunpack.c.l.b16 %v89
    %v904 = vunpack.c.l.b16 %v90
    %v905 = vunpack.c.l.b16 %v91
    %v906 = vunpack.c.l.b16 %v92
    %v907 = vunpack.c.l.b16 %v93
    %v908 = vunpack.c.l.b16 %v94
    %v909 = vunpack.c.l.b16 %v95
    %v910 = vunpack.c.l.b16 %v96
    %v911 = vunpack.c.l.b16 %v97
    %v912 = vpack.c.b16 %v897, %v896
    %v913 = vpack.c.b16 %v899, %v898
    %v914 = vpack.c.b16 %v901, %v900
    %v915 = vpack.c.b16 %v903, %v902
    %v916 = vpack.c.b16 %v905, %v904
    %v917 = vpack.c.b16 %v907, %v906
    %v918 = vpack.c.b16 %v909, %v908
    %v919 = vpack.c.b16 %v911, %v910
    %928 = vmatprep.subr.bf16.mxu0 0
    %929 = vmatpush1.bf16.msra.mxu0 %v919
    %930 = vmatprep.subr.bf16.mxu0 0
    %931 = vmatpush1.bf16.msra.mxu0 %v918
    %932 = vmatprep.subr.bf16.mxu0 0
    %933 = vmatpush1.bf16.msra.mxu0 %v917
    %934 = vmatprep.subr.bf16.mxu0 0
    %935 = vmatpush1.bf16.msra.mxu0 %v916
    %936 = vmatprep.subr.bf16.mxu0 0
    %937 = vmatpush1.bf16.msra.mxu0 %v915
    %938 = vmatprep.subr.bf16.mxu0 0
    %939 = vmatpush1.bf16.msra.mxu0 %v914
    %940 = vmatprep.subr.bf16.mxu0 0
    %941 = vmatpush1.bf16.msra.mxu0 %v913
    %942 = vmatprep.subr.bf16.mxu0 0
    %943 = vmatpush1.bf16.msra.mxu0 %v912
    %944 = vmatprep.subr.bf16.mxu0 0
    %945 = vmatpush2.bf16.msra.mxu0 0
    %946 = vmatprep.subr.bf16.mxu0 0
    %947 = vmatpush2.bf16.msra.mxu0 0
    %948 = vmatprep.subr.bf16.mxu0 0
    %949 = vmatpush2.bf16.msra.mxu0 0
    %950 = vmatprep.subr.bf16.mxu0 0
    %951 = vmatpush2.bf16.msra.mxu0 0
    %952 = vmatprep.subr.bf16.mxu0 0
    %953 = vmatpush2.bf16.msra.mxu0 0
    %954 = vmatprep.subr.bf16.mxu0 0
    %955 = vmatpush2.bf16.msra.mxu0 0
    %956 = vmatprep.subr.bf16.mxu0 0
    %957 = vmatpush2.bf16.msra.mxu0 0
    %958 = vmatprep.subr.bf16.mxu0 0
    %959 = vmatpush2.bf16.msra.mxu0 0
    %960 = vmatprep.mubr.bf16.mxu0 0
    %961 = vmatmul.mubr.bf16.gmra.mxu0 %v872
    %v962 = vpop.f32.mrf.mxu0
    %v963 = vadd.f32 0.0, %v962
    %v964 = vpop.f32.mrf.mxu0
    %v965 = vpop.f32.mrf.mxu0
    %v966 = vadd.f32 0.0, %v965
    %v967 = vpop.f32.mrf.mxu0
    %968 = vmatprep.mubr.bf16.mxu0 0
    %969 = vmatmul.mubr.bf16.gmra.mxu0 %v873
    %v970 = vpop.f32.mrf.mxu0
    %v971 = vadd.f32 0.0, %v970
    %v972 = vpop.f32.mrf.mxu0
    %v973 = vpop.f32.mrf.mxu0
    %v974 = vadd.f32 0.0, %v973
    %v975 = vpop.f32.mrf.mxu0
    %976 = vmatprep.mubr.bf16.mxu0 0
    %977 = vmatmul.mubr.bf16.gmra.mxu0 %v874
    %v978 = vpop.f32.mrf.mxu0
    %v979 = vadd.f32 0.0, %v978
    %v980 = vpop.f32.mrf.mxu0
    %v981 = vpop.f32.mrf.mxu0
    %v982 = vadd.f32 0.0, %v981
    %v983 = vpop.f32.mrf.mxu0
    %984 = vmatprep.mubr.bf16.mxu0 0
    %985 = vmatmul.mubr.bf16.gmra.mxu0 %v875
    %v986 = vpop.f32.mrf.mxu0
    %v987 = vadd.f32 0.0, %v986
    %v988 = vpop.f32.mrf.mxu0
    %v989 = vpop.f32.mrf.mxu0
    %v990 = vadd.f32 0.0, %v989
    %v991 = vpop.f32.mrf.mxu0
    %992 = vmatprep.mubr.bf16.mxu0 0
    %993 = vmatmul.mubr.bf16.gmra.mxu0 %v876
    %v994 = vpop.f32.mrf.mxu0
    %v995 = vadd.f32 0.0, %v994
    %v996 = vpop.f32.mrf.mxu0
    %v997 = vpop.f32.mrf.mxu0
    %v998 = vadd.f32 0.0, %v997
    %v999 = vpop.f32.mrf.mxu0
    %1000 = vmatprep.mubr.bf16.mxu0 0
    %1001 = vmatmul.mubr.bf16.gmra.mxu0 %v877
    %v1002 = vpop.f32.mrf.mxu0
    %v1003 = vadd.f32 0.0, %v1002
    %v1004 = vpop.f32.mrf.mxu0
    %v1005 = vpop.f32.mrf.mxu0
    %v1006 = vadd.f32 0.0, %v1005
    %v1007 = vpop.f32.mrf.mxu0
    %1008 = vmatprep.mubr.bf16.mxu0 0
    %1009 = vmatmul.mubr.bf16.gmra.mxu0 %v878
    %v1010 = vpop.f32.mrf.mxu0
    %v1011 = vadd.f32 0.0, %v1010
    %v1012 = vpop.f32.mrf.mxu0
    %v1013 = vpop.f32.mrf.mxu0
    %v1014 = vadd.f32 0.0, %v1013
    %v1015 = vpop.f32.mrf.mxu0
    %1016 = vmatprep.mubr.bf16.mxu0 0
    %1017 = vmatmul.mubr.bf16.gmra.mxu0 %v879
    %v1018 = vpop.f32.mrf.mxu0
    %v1019 = vadd.f32 0.0, %v1018
    %v1020 = vpop.f32.mrf.mxu0
    %v1021 = vpop.f32.mrf.mxu0
    %v1022 = vadd.f32 0.0, %v1021
    %v1023 = vpop.f32.mrf.mxu0
    %1024 = vdwg.mxu0
    %v1025 = vadd.f32 %v810, %v963
    %v1026 = vadd.f32 %v813, %v966
    %v1027 = vadd.f32 %v818, %v971
    %v1028 = vadd.f32 %v821, %v974
    %v1029 = vadd.f32 %v826, %v979
    %v1030 = vadd.f32 %v829, %v982
    %v1031 = vadd.f32 %v834, %v987
    %v1032 = vadd.f32 %v837, %v990
    %v1033 = vadd.f32 %v842, %v995
    %v1034 = vadd.f32 %v845, %v998
    %v1035 = vadd.f32 %v850, %v1003
    %v1036 = vadd.f32 %v853, %v1006
    %v1037 = vadd.f32 %v858, %v1011
    %v1038 = vadd.f32 %v861, %v1014
    %v1039 = vadd.f32 %v866, %v1019
    %v1040 = vadd.f32 %v869, %v1022
    %v1041 = vlaneseq
    %v1042 = vshrl.u32 %v1041, 7
    %v1043 = vsub.s32 0, %v1042
    %v1044 = vrot.slane %v48, %v1043
    %v1045 = vadd.f32 %v1025, %v1044
    %v1046 = vadd.f32 %v1026, %v1044
    %v1047 = vadd.f32 %v1027, %v1044
    %v1048 = vadd.f32 %v1028, %v1044
    %v1049 = vadd.f32 %v1029, %v1044
    %v1050 = vadd.f32 %v1030, %v1044
    %v1051 = vadd.f32 %v1031, %v1044
    %v1052 = vadd.f32 %v1032, %v1044
    %v1053 = vadd.f32 %v1033, %v1044
    %v1054 = vadd.f32 %v1034, %v1044
    %v1055 = vadd.f32 %v1035, %v1044
    %v1056 = vadd.f32 %v1036, %v1044
    %v1057 = vadd.f32 %v1037, %v1044
    %v1058 = vadd.f32 %v1038, %v1044
    %v1059 = vadd.f32 %v1039, %v1044
    %v1060 = vadd.f32 %v1040, %v1044
    %v1061 = vmax.f32 %v1045, 0.0
    %v1062 = vmax.f32 %v1046, 0.0
    %v1063 = vmax.f32 %v1047, 0.0
    %v1064 = vmax.f32 %v1048, 0.0
    %v1065 = vmax.f32 %v1049, 0.0
    %v1066 = vmax.f32 %v1050, 0.0
    %v1067 = vmax.f32 %v1051, 0.0
    %v1068 = vmax.f32 %v1052, 0.0
    %v1069 = vmax.f32 %v1053, 0.0
    %v1070 = vmax.f32 %v1054, 0.0
    %v1071 = vmax.f32 %v1055, 0.0
    %v1072 = vmax.f32 %v1056, 0.0
    %v1073 = vmax.f32 %v1057, 0.0
    %v1074 = vmax.f32 %v1058, 0.0
    %v1075 = vmax.f32 %v1059, 0.0
    %v1076 = vmax.f32 %v1060, 0.0
    %v1077 = vadd.f32 %v1061, %v1062
    %v1078 = vrot.slane %v1077, 4
    %v1079 = vadd.f32 %v1077, %v1078
    %v1080 = vrot.slane %v1079, 2
    %v1081 = vadd.f32 %v1079, %v1080
    %v1082 = vrot.slane %v1081, 1
    %v1083 = vadd.f32 %v1081, %v1082
    %v1084 = vadd.f32 %v1063, %v1064
    %v1085 = vrot.slane %v1084, 4
    %v1086 = vadd.f32 %v1084, %v1085
    %v1087 = vrot.slane %v1086, 2
    %v1088 = vadd.f32 %v1086, %v1087
    %v1089 = vrot.slane %v1088, 1
    %v1090 = vadd.f32 %v1088, %v1089
    %v1091 = vadd.f32 %v1065, %v1066
    %v1092 = vrot.slane %v1091, 4
    %v1093 = vadd.f32 %v1091, %v1092
    %v1094 = vrot.slane %v1093, 2
    %v1095 = vadd.f32 %v1093, %v1094
    %v1096 = vrot.slane %v1095, 1
    %v1097 = vadd.f32 %v1095, %v1096
    %v1098 = vadd.f32 %v1067, %v1068
    %v1099 = vrot.slane %v1098, 4
    %v1100 = vadd.f32 %v1098, %v1099
    %v1101 = vrot.slane %v1100, 2
    %v1102 = vadd.f32 %v1100, %v1101
    %v1103 = vrot.slane %v1102, 1
    %v1104 = vadd.f32 %v1102, %v1103
    %v1105 = vadd.f32 %v1069, %v1070
    %v1106 = vrot.slane %v1105, 4
    %v1107 = vadd.f32 %v1105, %v1106
    %v1108 = vrot.slane %v1107, 2
    %v1109 = vadd.f32 %v1107, %v1108
    %v1110 = vrot.slane %v1109, 1
    %v1111 = vadd.f32 %v1109, %v1110
    %v1112 = vadd.f32 %v1071, %v1072
    %v1113 = vrot.slane %v1112, 4
    %v1114 = vadd.f32 %v1112, %v1113
    %v1115 = vrot.slane %v1114, 2
    %v1116 = vadd.f32 %v1114, %v1115
    %v1117 = vrot.slane %v1116, 1
    %v1118 = vadd.f32 %v1116, %v1117
    %v1119 = vadd.f32 %v1073, %v1074
    %v1120 = vrot.slane %v1119, 4
    %v1121 = vadd.f32 %v1119, %v1120
    %v1122 = vrot.slane %v1121, 2
    %v1123 = vadd.f32 %v1121, %v1122
    %v1124 = vrot.slane %v1123, 1
    %v1125 = vadd.f32 %v1123, %v1124
    %v1126 = vadd.f32 %v1075, %v1076
    %v1127 = vrot.slane %v1126, 4
    %v1128 = vadd.f32 %v1126, %v1127
    %v1129 = vrot.slane %v1128, 2
    %v1130 = vadd.f32 %v1128, %v1129
    %v1131 = vrot.slane %v1130, 1
    %v1132 = vadd.f32 %v1130, %v1131
    %v1133 = vrcp.pop 16.0
    %v1134 = vmul.f32 %v1083, %v1133
    %v1135 = vmul.f32 %v1090, %v1133
    %v1136 = vmul.f32 %v1097, %v1133
    %v1137 = vmul.f32 %v1104, %v1133
    %v1138 = vmul.f32 %v1111, %v1133
    %v1139 = vmul.f32 %v1118, %v1133
    %v1140 = vmul.f32 %v1125, %v1133
    %v1141 = vmul.f32 %v1132, %v1133
    %v1142 = vpack.c.bf16 %v1134, %v1134
    %v1143 = vpack.c.bf16 %v1135, %v1135
    %v1144 = vpack.c.bf16 %v1136, %v1136
    %v1145 = vpack.c.bf16 %v1137, %v1137
    %v1146 = vpack.c.bf16 %v1138, %v1138
    %v1147 = vpack.c.bf16 %v1139, %v1139
    %v1148 = vpack.c.bf16 %v1140, %v1140
    %v1149 = vpack.c.bf16 %v1141, %v1141
    %v1150 = vlaneseq
    %v1151 = vshrl.u32 %v1150, 7
    %v1152 = vsub.s32 0, %v1151
    %v1153 = vrot.slane %v49, %v1152
    %v1162 = vunpack.c.l.b16 %v1142
    %v1163 = vunpack.c.l.b16 %v1143
    %v1164 = vunpack.c.l.b16 %v1144
    %v1165 = vunpack.c.l.b16 %v1145
    %v1166 = vunpack.c.l.b16 %v1146
    %v1167 = vunpack.c.l.b16 %v1147
    %v1168 = vunpack.c.l.b16 %v1148
    %v1169 = vunpack.c.l.b16 %v1149
    %vm1170 = vcmask 1041409
    %v1171 = vsel %vm1170, %v1163, %v1162
    %vm1172 = vcmask 1042434
    %v1173 = vsel %vm1172, %v1164, %v1171
    %vm1174 = vcmask 1043459
    %v1175 = vsel %vm1174, %v1165, %v1173
    %vm1176 = vcmask 1044484
    %v1177 = vsel %vm1176, %v1166, %v1175
    %vm1178 = vcmask 1045509
    %v1179 = vsel %vm1178, %v1167, %v1177
    %vm1180 = vcmask 1046534
    %v1181 = vsel %vm1180, %v1168, %v1179
    %vm1182 = vcmask 1047559
    %v1183 = vsel %vm1182, %v1169, %v1181
    %v1184 = vpack.c.b16 %v1183, %v1183
    %v1202 = vunpack.c.l.b16 %v98
    %v1203 = vunpack.c.l.b16 %v99
    %v1204 = vunpack.c.l.b16 %v100
    %v1205 = vunpack.c.l.b16 %v101
    %v1206 = vunpack.c.l.b16 %v102
    %v1207 = vunpack.c.l.b16 %v103
    %v1208 = vunpack.c.l.b16 %v104
    %v1209 = vunpack.c.l.b16 %v105
    %v1210 = vunpack.c.l.b16 %v106
    %v1211 = vunpack.c.l.b16 %v107
    %v1212 = vunpack.c.l.b16 %v108
    %v1213 = vunpack.c.l.b16 %v109
    %v1214 = vunpack.c.l.b16 %v110
    %v1215 = vunpack.c.l.b16 %v111
    %v1216 = vunpack.c.l.b16 %v112
    %v1217 = vunpack.c.l.b16 %v113
    %v1218 = vpack.c.b16 %v1203, %v1202
    %v1219 = vpack.c.b16 %v1205, %v1204
    %v1220 = vpack.c.b16 %v1207, %v1206
    %v1221 = vpack.c.b16 %v1209, %v1208
    %v1222 = vpack.c.b16 %v1211, %v1210
    %v1223 = vpack.c.b16 %v1213, %v1212
    %v1224 = vpack.c.b16 %v1215, %v1214
    %v1225 = vpack.c.b16 %v1217, %v1216
    %1234 = vmatprep.subr.bf16.mxu0 0
    %1235 = vmatpush1.bf16.msra.mxu0 %v1225
    %1236 = vmatprep.subr.bf16.mxu0 0
    %1237 = vmatpush1.bf16.msra.mxu0 %v1224
    %1238 = vmatprep.subr.bf16.mxu0 0
    %1239 = vmatpush1.bf16.msra.mxu0 %v1223
    %1240 = vmatprep.subr.bf16.mxu0 0
    %1241 = vmatpush1.bf16.msra.mxu0 %v1222
    %1242 = vmatprep.subr.bf16.mxu0 0
    %1243 = vmatpush1.bf16.msra.mxu0 %v1221
    %1244 = vmatprep.subr.bf16.mxu0 0
    %1245 = vmatpush1.bf16.msra.mxu0 %v1220
    %1246 = vmatprep.subr.bf16.mxu0 0
    %1247 = vmatpush1.bf16.msra.mxu0 %v1219
    %1248 = vmatprep.subr.bf16.mxu0 0
    %1249 = vmatpush1.bf16.msra.mxu0 %v1218
    %1250 = vmatprep.subr.bf16.mxu0 0
    %1251 = vmatpush2.bf16.msra.mxu0 0
    %1252 = vmatprep.subr.bf16.mxu0 0
    %1253 = vmatpush2.bf16.msra.mxu0 0
    %1254 = vmatprep.subr.bf16.mxu0 0
    %1255 = vmatpush2.bf16.msra.mxu0 0
    %1256 = vmatprep.subr.bf16.mxu0 0
    %1257 = vmatpush2.bf16.msra.mxu0 0
    %1258 = vmatprep.subr.bf16.mxu0 0
    %1259 = vmatpush2.bf16.msra.mxu0 0
    %1260 = vmatprep.subr.bf16.mxu0 0
    %1261 = vmatpush2.bf16.msra.mxu0 0
    %1262 = vmatprep.subr.bf16.mxu0 0
    %1263 = vmatpush2.bf16.msra.mxu0 0
    %1264 = vmatprep.subr.bf16.mxu0 0
    %1265 = vmatpush2.bf16.msra.mxu0 0
    %1266 = vmatprep.mubr.bf16.mxu0 0
    %1267 = vmatmul.mubr.bf16.gmra.mxu0 %v1184
    %v1268 = vpop.f32.mrf.mxu0
    %v1269 = vadd.f32 %v1153, %v1268
    %v1270 = vpop.f32.mrf.mxu0
    %v1271 = vpop.f32.mrf.mxu0
    %v1272 = vpop.f32.mrf.mxu0
    %1273 = vdwg.mxu0
    %1274 = vst [vmem:[%s4] sm:$0xff] %v1269
    // Predicated region
    $region26: #{proof_predictor_cnn.1} parent=1 // pred_check
      _
    $region27: #{proof_predictor_cnn.1} parent=1 // pred_check_branch
      %1276 = sbr.rel (0) target = $region29
    $region28: #{proof_predictor_cnn.1} parent=1 // pred_region
      _
    $region29: #{proof_predictor_cnn.1} parent=1 // pred_fallthru
      _
    // Predicated region
    $region30: #{proof_predictor_cnn.1} parent=1 // pred_check
      _
    $region31: #{proof_predictor_cnn.1} parent=1 // pred_check_branch
      %1278 = sbr.rel (0) target = $region33
    $region32: #{proof_predictor_cnn.1} parent=1 // pred_region
      _
    $region33: #{proof_predictor_cnn.1} parent=1 // pred_fallthru
      _
    %1279 = vsyncpa [#allocation3], 1
    %1280 = vsyncpa [#allocation5], 1

</llo_original>
